<compile_context>
chip_gen: v5e
topology: v5e:2x2
jax: 0.10.0
libtpu: 0.0.40
codegen_flags: <defaults>
</compile_context>

<pallas_src>
import functools

import jax
import jax.numpy as jnp
from jax import lax
from jax.experimental import pallas as pl
from jax.experimental.pallas import tpu as pltpu

LANE = 128       # lane width of a vreg
ACC_ROWS = 64    # accumulator sublane rows -> 8 independent f32 vreg chains


def _msre_kernel(x_ref, t_ref, o_ref, acc_ref, *, eps, rows, tile_rows,
                 needs_mask):
    i = pl.program_id(0)
    last = pl.num_programs(0) - 1

    # zero the vector accumulator on the first tile
    @pl.when(i == 0)
    def _():
        acc_ref[...] = jnp.zeros_like(acc_ref)

    x = x_ref[...].astype(jnp.float32)
    t = t_ref[...].astype(jnp.float32)
    rel = (x - t) / (t + jnp.float32(eps))
    rel2 = rel * rel

    def _accumulate(r2):
        acc_rows = acc_ref.shape[0]
        if tile_rows % acc_rows == 0:
            # 8 independent vreg add chains (latency-hiding under HBM roofline)
            partial = r2.reshape(tile_rows // acc_rows, acc_rows, LANE).sum(axis=0)
            acc_ref[...] = acc_ref[...] + partial
        elif tile_rows % 8 == 0:
            partial = r2.reshape(tile_rows // 8, 8, LANE).sum(axis=0)
            acc_ref[pl.ds(0, 8), :] = acc_ref[pl.ds(0, 8), :] + partial
        else:
            # tiny-array path (rows < 8): accumulate into sublane row 0 only
            partial = jnp.sum(r2, axis=0, keepdims=True)
            acc_ref[pl.ds(0, 1), :] = acc_ref[pl.ds(0, 1), :] + partial

    if needs_mask:
        # Interior tiles: plain accumulate, no mask work.
        @pl.when(i != last)
        def _():
            _accumulate(rel2)

        # Only the final (partial) tile pays for iota / compare / select.
        @pl.when(i == last)
        def _():
            row = lax.broadcasted_iota(jnp.int32, (tile_rows, LANE), 0)
            valid = (i * tile_rows + row) < rows   # row-only compare, no overflow
            _accumulate(jnp.where(valid, rel2, jnp.float32(0.0)))
    else:
        _accumulate(rel2)

    # single full reduce on the last tile; scalar goes to SMEM
    @pl.when(i == last)
    def _():
        o_ref[0, 0] = jnp.sum(acc_ref[...])


def _row_multiple(dtype):
    itemsize = jnp.dtype(dtype).itemsize
    return {4: 8, 2: 16, 1: 32}.get(itemsize, 8)


def msre_loss(x, target, eps=1e-8, *, tile_rows=8192):
    """Pallas implementation of MSRELoss.forward. Returns a float32 scalar."""
    assert x.shape == target.shape, "input/target shapes must match"
    total = int(x.size)

    xf = jnp.ravel(x)
    tf = jnp.ravel(target)

    rows = total // LANE
    n_main = rows * LANE
    n_tail = total - n_main

    # Ragged tail (< 128 elements): plain jnp outside the kernel.  This avoids
    # materializing a padded copy of the full flattened arrays.
    tail_sum = jnp.float32(0.0)
    if n_tail:
        xt = xf[n_main:].astype(jnp.float32)
        tt = tf[n_main:].astype(jnp.float32)
        rt = (xt - tt) / (tt + jnp.float32(eps))
        tail_sum = jnp.sum(rt * rt)

    if rows == 0:
        # everything fits in the tail; no kernel launch needed
        return tail_sum / jnp.float32(total)

    x2 = xf[:n_main].reshape(rows, LANE)
    t2 = tf[:n_main].reshape(rows, LANE)

    # Tile selection: as large as requested, rounded to the sublane-packing
    # multiple for the input dtypes, never larger than the array.
    mult = max(_row_multiple(x.dtype), _row_multiple(target.dtype))
    tile_rows = min(int(tile_rows), rows)
    if rows >= mult:
        tile_rows = max(mult, (tile_rows // mult) * mult)
    # else: tile_rows == rows (full-extent block, always legal)

    grid = (pl.cdiv(rows, tile_rows),)
    needs_mask = (rows % tile_rows) != 0

    # Explicit VMEM budget: 2 inputs x 2 buffers x tile bytes + headroom, so
    # the 8192-row tile works on v5e's 16 MiB default scoped limit too.
    block_bytes = tile_rows * LANE * (
        jnp.dtype(x.dtype).itemsize + jnp.dtype(target.dtype).itemsize)
    vmem_limit = int(min(40 << 20, max(16 << 20, 2 * block_bytes + (8 << 20))))

    bytes_accessed = n_main * (jnp.dtype(x.dtype).itemsize
                               + jnp.dtype(target.dtype).itemsize) + 4
    cost = pl.CostEstimate(flops=5 * n_main, transcendentals=0,
                           bytes_accessed=bytes_accessed)

    kernel = functools.partial(
        _msre_kernel,
        eps=float(eps),
        rows=rows,
        tile_rows=tile_rows,
        needs_mask=needs_mask,
    )

    main_sum = pl.pallas_call(
        kernel,
        out_shape=jax.ShapeDtypeStruct((1, 1), jnp.float32),
        grid_spec=pltpu.PrefetchScalarGridSpec(
            num_scalar_prefetch=0,
            grid=grid,
            in_specs=[
                pl.BlockSpec((tile_rows, LANE), lambda i: (i, 0)),
                pl.BlockSpec((tile_rows, LANE), lambda i: (i, 0)),
            ],
            out_specs=pl.BlockSpec(memory_space=pltpu.MemorySpace.SMEM),
            scratch_shapes=[pltpu.VMEM((ACC_ROWS, LANE), jnp.float32)],
        ),
        compiler_params=pltpu.CompilerParams(
            dimension_semantics=("arbitrary",),  # reduction axis
            vmem_limit_bytes=vmem_limit,
        ),
        cost_estimate=cost,
    )(x2, t2)[0, 0]

    return (main_sum + tail_sum) / jnp.float32(total)


if __name__ == "__main__":
    key = jax.random.PRNGKey(0)
    k1, k2, k3, k4, k5, k6 = jax.random.split(key, 6)

    # small NCHW-like tensors, consistent with a generic loss module
    shape = (2, 4, 16, 16)
    x = jax.random.normal(k1, shape, dtype=jnp.float32)
    # keep targets away from zero so the relative error is well-behaved
    target = jax.random.normal(k2, shape, dtype=jnp.float32) + 2.0

    loss = jax.block_until_ready(msre_loss(x, target))
    rel = (x - target) / (target + 1e-8)
    ref = jnp.mean(rel * rel)
    assert jnp.allclose(loss, ref, rtol=1e-5, atol=1e-6), (loss, ref)

    # exercise the multi-tile + masked-last-tile + ragged-tail path
    shape_b = (5, 300)   # 1500 elems -> 11 full rows of 128 + 92-elem tail
    xb = jax.random.normal(k3, shape_b, dtype=jnp.float32)
    tb = jax.random.normal(k4, shape_b, dtype=jnp.float32) + 2.0
    loss_b = jax.block_until_ready(msre_loss(xb, tb))
    rel_b = (xb - tb) / (tb + 1e-8)
    ref_b = jnp.mean(rel_b * rel_b)
    assert jnp.allclose(loss_b, ref_b, rtol=1e-5, atol=1e-6), (loss_b, ref_b)

    # exercise the pure-tail path (numel < 128)
    shape_c = (3, 5, 7)
    xc = jax.random.normal(k5, shape_c, dtype=jnp.float32)
    tc = jax.random.normal(k6, shape_c, dtype=jnp.float32) + 2.0
    loss_c = jax.block_until_ready(msre_loss(xc, tc))
    rel_c = (xc - tc) / (tc + 1e-8)
    ref_c = jnp.mean(rel_c * rel_c)
    assert jnp.allclose(loss_c, ref_c, rtol=1e-5, atol=1e-6), (loss_c, ref_c)

    print("KERNEL_OK")
</pallas_src>

<mosaic_0001>
module attributes {stable_mosaic.version = 11 : i64} {
  func.func @_msre_kernel(%arg0: i32, %arg1: memref<16x128xf32, #tpu.memory_space<vmem>>, %arg2: memref<16x128xf32, #tpu.memory_space<vmem>>, %arg3: memref<1x1xf32, #tpu.memory_space<smem>>, %arg4: memref<64x128xf32, #tpu.memory_space<vmem>>) attributes {dimension_semantics = [#tpu.dimension_semantics<arbitrary>], iteration_bounds = array<i64: 1>, scalar_prefetch = 0 : i64, scratch_operands = 1 : i64, tpu.core_type = #tpu.core_type<tc>, window_params = [{transform_indices = @transform_0, window_bounds = array<i64: 16, 128>}, {transform_indices = @transform_1, window_bounds = array<i64: 16, 128>}, {transform_indices = @transform_2, window_bounds = array<i64: 1, 1>}]} {
    %c0_i32 = arith.constant 0 : i32
    %0 = arith.cmpi eq, %arg0, %c0_i32 : i32
    %1 = arith.extui %0 : i1 to i32
    %c0_i32_0 = arith.constant 0 : i32
    %2 = arith.cmpi ne, %1, %c0_i32_0 : i32
    scf.if %2 {
      %cst_11 = arith.constant 0.000000e+00 : f32
      %18 = vector.broadcast %cst_11 : f32 to vector<64x128xf32>
      %c0_12 = arith.constant 0 : index
      %c0_13 = arith.constant 0 : index
      %19 = vector.load %arg4[%c0_12, %c0_13] : memref<64x128xf32, #tpu.memory_space<vmem>>, vector<64x128xf32>
      tpu.vector_store %arg4[%c0_12, %c0_13], %18 {strides = array<i32>} : memref<64x128xf32, #tpu.memory_space<vmem>>, vector<64x128xf32>,
    } else {
    }
    %c0 = arith.constant 0 : index
    %c0_1 = arith.constant 0 : index
    %3 = vector.load %arg1[%c0, %c0_1] : memref<16x128xf32, #tpu.memory_space<vmem>>, vector<16x128xf32>
    %c0_2 = arith.constant 0 : index
    %c0_3 = arith.constant 0 : index
    %4 = vector.load %arg2[%c0_2, %c0_3] : memref<16x128xf32, #tpu.memory_space<vmem>>, vector<16x128xf32>
    %5 = arith.subf %3, %4 : vector<16x128xf32>
    %cst = arith.constant 9.99999993E-9 : f32
    %6 = vector.broadcast %cst : f32 to vector<16x128xf32>
    %7 = arith.addf %4, %6 : vector<16x128xf32>
    %8 = arith.divf %5, %7 : vector<16x128xf32>
    %9 = arith.mulf %8, %8 : vector<16x128xf32>
    %10 = vector.shape_cast %9 : vector<16x128xf32> to vector<2x8x128xf32>
    %cst_4 = arith.constant dense<0.000000e+00> : vector<8x128xf32>
    %11 = vector.multi_reduction <add>, %10, %cst_4 [0] : vector<2x8x128xf32> to vector<8x128xf32>
    %c0_5 = arith.constant 0 : index
    %c0_6 = arith.constant 0 : index
    %12 = vector.load %arg4[%c0_5, %c0_6] : memref<64x128xf32, #tpu.memory_space<vmem>>, vector<8x128xf32>
    %13 = arith.addf %12, %11 : vector<8x128xf32>
    %c0_7 = arith.constant 0 : index
    %c0_8 = arith.constant 0 : index
    %14 = vector.load %arg4[%c0_7, %c0_8] : memref<64x128xf32, #tpu.memory_space<vmem>>, vector<8x128xf32>
    tpu.vector_store %arg4[%c0_7, %c0_8], %13 {strides = array<i32>} : memref<64x128xf32, #tpu.memory_space<vmem>>, vector<8x128xf32>,
    %c0_i32_9 = arith.constant 0 : i32
    %15 = arith.cmpi eq, %arg0, %c0_i32_9 : i32
    %16 = arith.extui %15 : i1 to i32
    %c0_i32_10 = arith.constant 0 : i32
    %17 = arith.cmpi ne, %16, %c0_i32_10 : i32
    scf.if %17 {
      %c0_11 = arith.constant 0 : index
      %c0_12 = arith.constant 0 : index
      %18 = vector.load %arg4[%c0_11, %c0_12] : memref<64x128xf32, #tpu.memory_space<vmem>>, vector<64x128xf32>
      %19 = vector.shape_cast %18 : vector<64x128xf32> to vector<1x64x128xf32>
      %cst_13 = arith.constant dense<0.000000e+00> : vector<1xf32>
      %20 = vector.multi_reduction <add>, %19, %cst_13 [1, 2] : vector<1x64x128xf32> to vector<1xf32>
      %21 = vector.shape_cast %20 : vector<1xf32> to vector<1x1x1xf32>
      %22 = vector.extract %21[0, 0, 0] : f32 from vector<1x1x1xf32>
      %c0_14 = arith.constant 0 : index
      %c0_15 = arith.constant 0 : index
      %23 = memref.load %arg3[%c0_14, %c0_15] : memref<1x1xf32, #tpu.memory_space<smem>>
      memref.store %22, %arg3[%c0_14, %c0_15] : memref<1x1xf32, #tpu.memory_space<smem>>
    } else {
    }
    return
  }
  func.func @transform_0(%arg0: i32) -> (i32, i32) {
    %c0_i32 = arith.constant 0 : i32
    %c0_i32_0 = arith.constant 0 : i32
    return %arg0, %c0_i32 : i32, i32
  }
  func.func @transform_1(%arg0: i32) -> (i32, i32) {
    %c0_i32 = arith.constant 0 : i32
    %c0_i32_0 = arith.constant 0 : i32
    return %arg0, %c0_i32 : i32, i32
  }
  func.func @transform_2(%arg0: i32) -> (i32, i32) {
    %c0_i32 = arith.constant 0 : i32
    %c0_i32_0 = arith.constant 0 : i32
    %c0_i32_1 = arith.constant 0 : i32
    return %c0_i32, %c0_i32_0 : i32, i32
  }
}

</mosaic_0001>

<llo_original>
// kernel: tpu_custom_call.1
$region0: #{tpu_custom_call.1}
  #allocation0 [shape = 'u32[]', space=smem, size = 0x4, offset = 0x4, fixed_abs, tag = 'smem constant byte address 0x4 - core index']
  #allocation1 [shape = 'u32[72,128]{1,0:T(1,128)}', space=vmem, size = 0x9000, scoped, tag = 'internal scratch']
  #allocation2 [shape = 'f32[64,128]{1,0:T(8,128)}', space=vmem, size = 0x8000, scoped, tag = 'scratch operand']
  %s0 = inlined_call_operand.hbm [shape: f32[16,128], index: 0, kind: input, shape index: {}]
  %s1 = inlined_call_operand.hbm [shape: f32[16,128], index: 1, kind: input, shape index: {}]
  %s2 = inlined_call_operand.hbm [shape: f32[1,1], index: 2, kind: output, shape index: {}]
  %s3 = sld [smem:[#allocation0]]
  $region34: #{tpu_custom_call.1} parent=0
    _
  %s5 = ssub.s32 1, %s3
  %s6 = scalar_select 0, %s5, %s3
  $region1: #{tpu_custom_call.1} parent=0
    #allocation3 [shape = 'u8[8192]{0}', space=vmem, size = 0x2000, scoped, tag = 'input window, operand 0, single buffered']
    #allocation4 [shape = 's32[1]{0}', space=sflag, size = 0x4, scoped, tag = 'scoped memory for tpu_custom_call.1']
    #allocation5 [shape = 's32[1]{0}', space=sflag, size = 0x4, scoped, tag = 'scoped memory for tpu_custom_call.1']
    #allocation6 [shape = 'u8[8192]{0}', space=vmem, size = 0x2000, scoped, tag = 'input window, operand 1, single buffered']
    #allocation7 [shape = 's32[1]{0}', space=sflag, size = 0x4, scoped, tag = 'scoped memory for tpu_custom_call.1']
    #allocation8 [shape = 'u8[512]{0}', space=smem, size = 0x200, scoped, tag = 'output window, operand 0, single buffered']
    %7 = vsyncpa [#allocation4], 0
    %8 = vsyncpa [#allocation7], 0
    %9 = vsyncpa [#allocation5], 0
    // Predicated region
    $region2: #{tpu_custom_call.1} parent=1 // pred_check
      _
    $region3: #{tpu_custom_call.1} parent=1 // pred_check_branch
      %11 = sbr.rel (0) target = $region5
    $region4: #{tpu_custom_call.1} parent=1 // pred_region
      %13 = vsyncadd [#allocation4], 0
      %s14 = sshll.u32 %s0, 4
      %s15 = int_to_ptr.hbm [resolvable:$true] %s14
      %s16 = sshll.u32 [#allocation3], 4
      %s17 = int_to_ptr.vmem [resolvable:$true] %s16
      %22 = dma.hbm_to_vmem [thread:$0]  %s15, 256, %s17, [#allocation4], 128, 128, 8
    $region5: #{tpu_custom_call.1} parent=1 // pred_fallthru
      _
    // Predicated region
    $region6: #{tpu_custom_call.1} parent=1 // pred_check
      _
    $region7: #{tpu_custom_call.1} parent=1 // pred_check_branch
      %24 = sbr.rel (0) target = $region9
    $region8: #{tpu_custom_call.1} parent=1 // pred_region
      %26 = vsyncadd [#allocation7], 0
      %s27 = sshll.u32 %s1, 4
      %s28 = int_to_ptr.hbm [resolvable:$true] %s27
      %s29 = sshll.u32 [#allocation6], 4
      %s30 = int_to_ptr.vmem [resolvable:$true] %s29
      %35 = dma.hbm_to_vmem [thread:$0]  %s28, 256, %s30, [#allocation7], 128, 128, 8
    $region9: #{tpu_custom_call.1} parent=1 // pred_fallthru
      _
    // Predicated region
    $region10: #{tpu_custom_call.1} parent=1 // pred_check
      _
    $region11: #{tpu_custom_call.1} parent=1 // pred_check_branch
      %37 = sbr.rel (0) target = $region13
    $region12: #{tpu_custom_call.1} parent=1 // pred_region
      %39 = dma.done [#allocation4], 256
    $region13: #{tpu_custom_call.1} parent=1 // pred_fallthru
      _
    // Predicated region
    $region14: #{tpu_custom_call.1} parent=1 // pred_check
      _
    $region15: #{tpu_custom_call.1} parent=1 // pred_check_branch
      %41 = sbr.rel (0) target = $region17
    $region16: #{tpu_custom_call.1} parent=1 // pred_region
      %43 = dma.done [#allocation7], 256
    $region17: #{tpu_custom_call.1} parent=1 // pred_fallthru
      _
    %p44 = scmp.eq.s32.totalorder 0, 0
    // Predicated region
    $region18: #{tpu_custom_call.1} parent=1 // pred_check
      %p45 = pneg %p44
    $region19: #{tpu_custom_call.1} parent=1 // pred_check_branch
      %47 = sbr.rel (%p45) target = $region21
    $region20: #{tpu_custom_call.1} parent=1 // pred_region
      %48 = vst [vmem:[#allocation2] sm:$0xff] 0.0
      %49 = vst [vmem:[#allocation2 + $0x8] sm:$0xff] 0.0
      %50 = vst [vmem:[#allocation2 + $0x10] sm:$0xff] 0.0
      %51 = vst [vmem:[#allocation2 + $0x18] sm:$0xff] 0.0
      %52 = vst [vmem:[#allocation2 + $0x20] sm:$0xff] 0.0
      %53 = vst [vmem:[#allocation2 + $0x28] sm:$0xff] 0.0
      %54 = vst [vmem:[#allocation2 + $0x30] sm:$0xff] 0.0
      %55 = vst [vmem:[#allocation2 + $0x38] sm:$0xff] 0.0
    $region21: #{tpu_custom_call.1} parent=1 // pred_fallthru
      _
    %v56 = vld [vmem:[#allocation3] sm:$0xff]
    %v57 = vld [vmem:[#allocation3 + $0x8] sm:$0xff]
    %v58 = vld [vmem:[#allocation6] sm:$0xff]
    %v59 = vld [vmem:[#allocation6 + $0x8] sm:$0xff]
    %v60 = vsub.f32 %v56, %v58
    %v61 = vsub.f32 %v57, %v59
    %v62 = vadd.f32 %v58, 1e-08
    %v63 = vadd.f32 %v59, 1e-08
    %v64 = vrcp.pop %v62
    %v65 = vmul.f32 %v62, %v64
    %v66 = vsub.f32 1.0, %v65
    %v67 = vmul.f32 %v64, %v66
    %v68 = vadd.f32 %v64, %v67
    %vm69 = vweird.f32 %v62
    %vm70 = vweird.f32 %v64
    %vm71 = vmor %vm69, %vm70
    %v72 = vsel %vm71, %v64, %v68
    %v73 = vand.u32 2147483647, %v62
    %vm74 = vcmp.eq.f32.partialorder %v73, 8.507059e+37
    %v75 = vand.u32 %v62, 2147483648
    %v76 = vor.u32 1.1754944e-38, %v75
    %v77 = vsel %vm74, %v76, %v72
    %v78 = vmul.f32 %v60, %v77
    %v79 = vrcp.pop %v63
    %v80 = vmul.f32 %v63, %v79
    %v81 = vsub.f32 1.0, %v80
    %v82 = vmul.f32 %v79, %v81
    %v83 = vadd.f32 %v79, %v82
    %vm84 = vweird.f32 %v63
    %vm85 = vweird.f32 %v79
    %vm86 = vmor %vm84, %vm85
    %v87 = vsel %vm86, %v79, %v83
    %v88 = vand.u32 2147483647, %v63
    %vm89 = vcmp.eq.f32.partialorder %v88, 8.507059e+37
    %v90 = vand.u32 %v63, 2147483648
    %v91 = vor.u32 1.1754944e-38, %v90
    %v92 = vsel %vm89, %v91, %v87
    %v93 = vmul.f32 %v61, %v92
    %v94 = vmul.f32 %v78, %v78
    %v95 = vmul.f32 %v93, %v93
    %v96 = vadd.f32 %v94, %v95
    %v97 = vld [vmem:[#allocation2] sm:$0xff]
    %v98 = vadd.f32 %v97, %v96
    %99 = vst [vmem:[#allocation2] sm:$0xff] %v98
    // Predicated region
    $region22: #{tpu_custom_call.1} parent=1 // pred_check
      %p100 = pneg %p44
    $region23: #{tpu_custom_call.1} parent=1 // pred_check_branch
      %102 = sbr.rel (%p100) target = $region25
    $region24: #{tpu_custom_call.1} parent=1 // pred_region
      %v103 = vld [vmem:[#allocation2] sm:$0xff]
      %v104 = vld [vmem:[#allocation2 + $0x8] sm:$0xff]
      %v105 = vld [vmem:[#allocation2 + $0x10] sm:$0xff]
      %v106 = vld [vmem:[#allocation2 + $0x18] sm:$0xff]
      %v107 = vld [vmem:[#allocation2 + $0x20] sm:$0xff]
      %v108 = vld [vmem:[#allocation2 + $0x28] sm:$0xff]
      %v109 = vld [vmem:[#allocation2 + $0x30] sm:$0xff]
      %v110 = vld [vmem:[#allocation2 + $0x38] sm:$0xff]
      %v111 = vadd.f32 %v103, %v104
      %v112 = vadd.f32 %v111, %v105
      %v113 = vadd.f32 %v112, %v106
      %v114 = vadd.f32 %v113, %v107
      %v115 = vadd.f32 %v114, %v108
      %v116 = vadd.f32 %v115, %v109
      %v117 = vadd.f32 %v116, %v110
      %118 = vadd.xlane.f32.xlu0 %v117
      %v119 = vpop.xlane.xlu0 %118
      %v120 = vrot.slane %v119, 4
      %v121 = vadd.f32 %v119, %v120
      %v122 = vrot.slane %v121, 2
      %v123 = vadd.f32 %v121, %v122
      %v124 = vrot.slane %v123, 1
      %v125 = vadd.f32 %v123, %v124
      %s126 = vtos %v125
      %s127 = scalar_lea.smem [#allocation8], 0
      %128 = sst [smem:[%s127]] %s126
    $region25: #{tpu_custom_call.1} parent=1 // pred_fallthru
      _
    // Predicated region
    $region26: #{tpu_custom_call.1} parent=1 // pred_check
      _
    $region27: #{tpu_custom_call.1} parent=1 // pred_check_branch
      %130 = sbr.rel (0) target = $region29
    $region28: #{tpu_custom_call.1} parent=1 // pred_region
      %132 = vsyncadd [#allocation5], 0
      %s134 = sshll.u32 %s2, 4
      %s135 = int_to_ptr.hbm [resolvable:$true] %s134
      %137 = dma.smem_to_hbm [#allocation8], 16, %s135, [#allocation5]
    $region29: #{tpu_custom_call.1} parent=1 // pred_fallthru
      _
    // Predicated region
    $region30: #{tpu_custom_call.1} parent=1 // pred_check
      _
    $region31: #{tpu_custom_call.1} parent=1 // pred_check_branch
      %139 = sbr.rel (0) target = $region33
    $region32: #{tpu_custom_call.1} parent=1 // pred_region
      %141 = dma.done [#allocation5], 16
    $region33: #{tpu_custom_call.1} parent=1 // pred_fallthru
      _
    %142 = sfence
    %143 = vsyncpa [#allocation4], 1
    %144 = vsyncpa [#allocation7], 1
    %145 = vsyncpa [#allocation5], 1

</llo_original>
